<compile_context>
chip_gen: v7x
topology: tpu7x:2x2x1
jax: 0.10.0
libtpu: 0.0.40
codegen_flags: <defaults>
</compile_context>

<pallas_src>
import functools

import jax
import jax.numpy as jnp
from jax.experimental import pallas as pl
from jax.experimental.pallas import tpu as pltpu


def _decoder_kernel(x_ref, w1_ref, b1_ref, w2_ref, b2_ref, w3_ref, b3_ref,
                    o_ref, *, out_is_scalar):
    # Layer 1: Linear + ReLU  (MXU matmul, f32 accumulation; bias/ReLU in f32).
    h = jnp.dot(x_ref[...], w1_ref[...], preferred_element_type=jnp.float32)
    h = jnp.maximum(h + b1_ref[...], 0.0)

    # Layer 2: Linear + ReLU  (cast back to the streaming dtype so bf16
    # weights keep the single-pass bf16 MXU path; no-op when everything is f32).
    h = jnp.dot(h.astype(w2_ref.dtype), w2_ref[...],
                preferred_element_type=jnp.float32)
    h = jnp.maximum(h + b2_ref[...], 0.0)

    # Layer 3: Linear + Sigmoid.
    if out_is_scalar:
        # Lane-dense output: contract w3 (1, H2) with h (tm, H2) on the hidden
        # dim -> (1, tm).  Dense EUP sigmoid + dense stores instead of a
        # (tm, 1) tile with one useful lane per vreg.
        z = jax.lax.dot_general(
            w3_ref[...], h.astype(w3_ref.dtype),
            dimension_numbers=(((1,), (1,)), ((), ())),
            preferred_element_type=jnp.float32)
        o_ref[...] = jax.nn.sigmoid(z + b3_ref[...])
    else:
        z = jnp.dot(h.astype(w3_ref.dtype), w3_ref[...],
                    preferred_element_type=jnp.float32)
        o_ref[...] = jax.nn.sigmoid(z + b3_ref[...])


def _round_up(a, m):
    return (a + m - 1) // m * m


_LANE = 128  # lane width; also keeps the MXU M-dim and bf16 sublane packing aligned


def _choose_row_tile(N, tm):
    """Row tile: 128-aligned (lane-dense output block legality), honors the
    request, and is capped so the grid has >= 2 steps when N allows (so the
    'parallel' grid axis shards across v7x's two TensorCores)."""
    if N <= _LANE:
        return N                                        # one exact full-array block
    tm = _round_up(max(min(tm, N), _LANE), _LANE)       # 128-aligned request
    half = _round_up(pl.cdiv(N, 2), _LANE)              # >= 2 grid steps
    return min(tm, half)


def interaction_decoder(x, w1, b1, w2, b2, w3, b3, *, tm=4096,
                        compute_dtype=jnp.bfloat16):
    """Fused 3-layer MLP decoder.  x: (N, C) -> (N, out_channels) float32.

    tm:            row tile.  Sweep 2048-8192.  v5e f32: cap ~4096 (or use
                   bf16); v6e/v7x: 4096 default fits comfortably in scoped
                   VMEM.  Clamped automatically so any N works.
    compute_dtype: streaming dtype for x and weights (default bfloat16 —
                   single-pass MXU + half the x HBM traffic; accumulation,
                   biases and activations stay f32).  Use None for pure f32.
                   Passing x already in bf16 avoids the conversion pass.
    """
    N, C = x.shape
    H1 = w1.shape[1]
    H2 = w2.shape[1]
    O = w3.shape[1]
    out_is_scalar = (O == 1)

    if compute_dtype is not None:
        x = x.astype(compute_dtype)
        w1 = w1.astype(compute_dtype)
        w2 = w2.astype(compute_dtype)
        w3 = w3.astype(compute_dtype)
    b1 = b1.reshape(1, H1).astype(jnp.float32)
    b2 = b2.reshape(1, H2).astype(jnp.float32)
    b3 = b3.reshape(1, O).astype(jnp.float32)

    tm = _choose_row_tile(N, tm)
    n_blocks = pl.cdiv(N, tm)   # ragged tail block handled by Pallas (no jnp.pad)

    # Present w3 as a lane-major (1, H2) row when the output is scalar.
    w3_in = w3.reshape(1, H2) if out_is_scalar else w3

    # Resident (constant index_map) specs for weights / biases.
    def resident(shape):
        return pl.BlockSpec(shape, lambda i: tuple(0 for _ in shape))

    if out_is_scalar:
        out_shape = jax.ShapeDtypeStruct((1, N), jnp.float32)
        out_spec = pl.BlockSpec((1, tm), lambda i: (0, i))     # lane-dense
    else:
        out_shape = jax.ShapeDtypeStruct((N, O), jnp.float32)
        out_spec = pl.BlockSpec((tm, O), lambda i: (i, 0))

    # Explicit VMEM budget: 2x x-tile + weights (double-buffered by default)
    # + biases + f32 activations + 2x output tile, with headroom.  Capped so
    # it stays inside every generation's physical VMEM (v7x: 64 MiB/TC).
    x_item = jnp.dtype(x.dtype).itemsize
    w_item = jnp.dtype(w1.dtype).itemsize
    vmem_est = (2 * tm * C * x_item
                + 2 * (C * H1 + H1 * H2 + H2 * O) * w_item
                + 2 * (H1 + H2 + O) * 4
                + tm * (H1 + H2) * 4
                + 2 * tm * O * 4)
    vmem_limit = int(min(max(2 * vmem_est, 32 * 1024 * 1024), 48 * 1024 * 1024))

    flops = 2 * N * (C * H1 + H1 * H2 + H2 * O)
    bytes_accessed = (x.size * x_item
                      + (C * H1 + H1 * H2 + H2 * O) * w_item
                      + (H1 + H2 + O) * 4
                      + N * O * 4)

    kernel = functools.partial(_decoder_kernel, out_is_scalar=out_is_scalar)

    out = pl.pallas_call(
        kernel,
        out_shape=out_shape,
        grid_spec=pltpu.PrefetchScalarGridSpec(
            num_scalar_prefetch=0,
            grid=(n_blocks,),
            in_specs=[
                pl.BlockSpec((tm, C), lambda i: (i, 0)),   # x row tile (streamed)
                resident((C, H1)),  resident((1, H1)),     # W1, b1 (resident)
                resident((H1, H2)), resident((1, H2)),     # W2, b2 (resident)
                resident(w3_in.shape), resident((1, O)),   # W3, b3 (resident)
            ],
            out_specs=out_spec,
        ),
        compiler_params=pltpu.CompilerParams(
            dimension_semantics=("parallel",),
            vmem_limit_bytes=vmem_limit),
        cost_estimate=pl.CostEstimate(
            flops=flops,
            transcendentals=2 * N * O,
            bytes_accessed=bytes_accessed),
    )(x, w1, b1, w2, b2, w3_in, b3)

    if out_is_scalar:
        return out.reshape(N, 1)
    return out


def _init_linear(key, fan_in, fan_out):
    """Deterministic init mimicking nn.Linear default: U(-1/sqrt(fan_in), +...)."""
    kw, kb = jax.random.split(key)
    bound = 1.0 / jnp.sqrt(jnp.float32(fan_in))
    w = jax.random.uniform(kw, (fan_in, fan_out), jnp.float32, -bound, bound)
    b = jax.random.uniform(kb, (1, fan_out), jnp.float32, -bound, bound)
    return w, b


def _reference(x, w1, b1, w2, b2, w3, b3):
    hp = jax.lax.Precision.HIGHEST
    h = jnp.maximum(jnp.dot(x, w1, precision=hp) + b1, 0.0)
    h = jnp.maximum(jnp.dot(h, w2, precision=hp) + b2, 0.0)
    return jax.nn.sigmoid(jnp.dot(h, w3, precision=hp) + b3)


if __name__ == "__main__":
    # Shapes consistent with the module: in_channels=32, hidden_dims=(256, 64),
    # out_channels=1.
    C, H1, H2, O = 32, 256, 64, 1

    key = jax.random.PRNGKey(0)
    kx, k1, k2, k3, kx2, k4 = jax.random.split(key, 6)

    w1, b1 = _init_linear(k1, C, H1)
    w2, b2 = _init_linear(k2, H1, H2)
    w3, b3 = _init_linear(k3, H2, O)

    # Case 1: tiny batch, default bf16 streaming (single exact full-array block,
    # lane-dense scalar output).  Loose tolerance for the bf16 inputs.
    N = 8
    x = jax.random.normal(kx, (N, C), jnp.float32)
    out = jax.block_until_ready(interaction_decoder(x, w1, b1, w2, b2, w3, b3))
    ref = _reference(x, w1, b1, w2, b2, w3, b3)
    assert out.shape == (N, O)
    assert bool(jnp.isfinite(out).all())
    assert jnp.allclose(out, ref, atol=3e-2, rtol=3e-2), "mismatch (N=8, bf16)"

    # Case 2: batch not divisible by the tile, pure f32 path (exercises the
    # ragged tail block + multi-step grid); bit-tight tolerance.
    N2 = 300
    x2 = jax.random.normal(kx2, (N2, C), jnp.float32)
    out2 = jax.block_until_ready(
        interaction_decoder(x2, w1, b1, w2, b2, w3, b3, compute_dtype=None))
    ref2 = _reference(x2, w1, b1, w2, b2, w3, b3)
    assert out2.shape == (N2, O)
    assert jnp.allclose(out2, ref2, atol=1e-5, rtol=1e-5), "mismatch (N=300, f32)"

    # Case 3: non-scalar head (out_channels=4) exercises the (tm, O) output branch.
    O3 = 4
    w3b, b3b = _init_linear(k4, H2, O3)
    out3 = jax.block_until_ready(
        interaction_decoder(x2, w1, b1, w2, b2, w3b, b3b,
                            compute_dtype=None, tm=128))
    ref3 = _reference(x2, w1, b1, w2, b2, w3b, b3b)
    assert out3.shape == (N2, O3)
    assert jnp.allclose(out3, ref3, atol=1e-5, rtol=1e-5), "mismatch (O=4, f32)"

    print("KERNEL_OK")
</pallas_src>

<mosaic_0001>
module attributes {stable_mosaic.version = 11 : i64} {
  func.func @_decoder_kernel(%arg0: i32, %arg1: memref<8x32xbf16, #tpu.memory_space<vmem>>, %arg2: memref<32x256xbf16, #tpu.memory_space<vmem>>, %arg3: memref<1x256xf32, #tpu.memory_space<vmem>>, %arg4: memref<256x64xbf16, #tpu.memory_space<vmem>>, %arg5: memref<1x64xf32, #tpu.memory_space<vmem>>, %arg6: memref<1x64xbf16, #tpu.memory_space<vmem>>, %arg7: memref<1x1xf32, #tpu.memory_space<vmem>>, %arg8: memref<1x8xf32, #tpu.memory_space<vmem>>) attributes {dimension_semantics = [#tpu.dimension_semantics<parallel>], iteration_bounds = array<i64: 1>, scalar_prefetch = 0 : i64, scratch_operands = 0 : i64, tpu.core_type = #tpu.core_type<tc>, window_params = [{transform_indices = @transform_0, window_bounds = array<i64: 8, 32>}, {pipeline_mode = #tpu.pipeline_mode<synchronous>, transform_indices = @transform_1, window_bounds = array<i64: 32, 256>}, {pipeline_mode = #tpu.pipeline_mode<synchronous>, transform_indices = @transform_2, window_bounds = array<i64: 1, 256>}, {pipeline_mode = #tpu.pipeline_mode<synchronous>, transform_indices = @transform_3, window_bounds = array<i64: 256, 64>}, {pipeline_mode = #tpu.pipeline_mode<synchronous>, transform_indices = @transform_4, window_bounds = array<i64: 1, 64>}, {pipeline_mode = #tpu.pipeline_mode<synchronous>, transform_indices = @transform_5, window_bounds = array<i64: 1, 64>}, {pipeline_mode = #tpu.pipeline_mode<synchronous>, transform_indices = @transform_6, window_bounds = array<i64: 1, 1>}, {transform_indices = @transform_7, window_bounds = array<i64: 1, 8>}]} {
    %c0 = arith.constant 0 : index
    %c0_0 = arith.constant 0 : index
    %0 = vector.load %arg1[%c0, %c0_0] : memref<8x32xbf16, #tpu.memory_space<vmem>>, vector<8x32xbf16>
    %c0_1 = arith.constant 0 : index
    %c0_2 = arith.constant 0 : index
    %1 = vector.load %arg2[%c0_1, %c0_2] : memref<32x256xbf16, #tpu.memory_space<vmem>>, vector<32x256xbf16>
    %cst = arith.constant dense<0.000000e+00> : vector<8x256xf32>
    %2 = tpu.matmul %0, %1, %cst {dimension_numbers = #tpu.dot_dimension_numbers<[1], [0], [0], [1], [0, 0, 1, 1], [], []>} : vector<8x32xbf16>, vector<32x256xbf16>, vector<8x256xf32> -> vector<8x256xf32>
    %c0_3 = arith.constant 0 : index
    %c0_4 = arith.constant 0 : index
    %3 = vector.load %arg3[%c0_3, %c0_4] : memref<1x256xf32, #tpu.memory_space<vmem>>, vector<1x256xf32>
    %4 = vector.broadcast %3 : vector<1x256xf32> to vector<8x256xf32>
    %5 = arith.addf %2, %4 : vector<8x256xf32>
    %cst_5 = arith.constant 0.000000e+00 : f32
    %6 = vector.broadcast %cst_5 : f32 to vector<8x256xf32>
    %7 = arith.maximumf %5, %6 : vector<8x256xf32>
    %8 = arith.truncf %7 : vector<8x256xf32> to vector<8x256xbf16>
    %c0_6 = arith.constant 0 : index
    %c0_7 = arith.constant 0 : index
    %9 = vector.load %arg4[%c0_6, %c0_7] : memref<256x64xbf16, #tpu.memory_space<vmem>>, vector<256x64xbf16>
    %cst_8 = arith.constant dense<0.000000e+00> : vector<8x64xf32>
    %10 = tpu.matmul %8, %9, %cst_8 {dimension_numbers = #tpu.dot_dimension_numbers<[1], [0], [0], [1], [0, 0, 1, 1], [], []>} : vector<8x256xbf16>, vector<256x64xbf16>, vector<8x64xf32> -> vector<8x64xf32>
    %c0_9 = arith.constant 0 : index
    %c0_10 = arith.constant 0 : index
    %11 = vector.load %arg5[%c0_9, %c0_10] : memref<1x64xf32, #tpu.memory_space<vmem>>, vector<1x64xf32>
    %12 = vector.broadcast %11 : vector<1x64xf32> to vector<8x64xf32>
    %13 = arith.addf %10, %12 : vector<8x64xf32>
    %cst_11 = arith.constant 0.000000e+00 : f32
    %14 = vector.broadcast %cst_11 : f32 to vector<8x64xf32>
    %15 = arith.maximumf %13, %14 : vector<8x64xf32>
    %c0_12 = arith.constant 0 : index
    %c0_13 = arith.constant 0 : index
    %16 = vector.load %arg6[%c0_12, %c0_13] : memref<1x64xbf16, #tpu.memory_space<vmem>>, vector<1x64xbf16>
    %17 = arith.truncf %15 : vector<8x64xf32> to vector<8x64xbf16>
    %cst_14 = arith.constant dense<0.000000e+00> : vector<1x8xf32>
    %18 = tpu.matmul %16, %17, %cst_14 {dimension_numbers = #tpu.dot_dimension_numbers<[1], [1], [0], [0], [0, 0, 1, 0], [], []>} : vector<1x64xbf16>, vector<8x64xbf16>, vector<1x8xf32> -> vector<1x8xf32>
    %c0_15 = arith.constant 0 : index
    %c0_16 = arith.constant 0 : index
    %19 = vector.load %arg7[%c0_15, %c0_16] : memref<1x1xf32, #tpu.memory_space<vmem>>, vector<1x1xf32>
    %20 = vector.broadcast %19 : vector<1x1xf32> to vector<1x8xf32>
    %21 = arith.addf %18, %20 : vector<1x8xf32>
    %22 = arith.negf %21 : vector<1x8xf32>
    %23 = math.exp %22 : vector<1x8xf32>
    %cst_17 = arith.constant 1.000000e+00 : f32
    %24 = vector.broadcast %cst_17 : f32 to vector<1x8xf32>
    %25 = arith.addf %24, %23 : vector<1x8xf32>
    %26 = arith.divf %24, %25 : vector<1x8xf32>
    %c0_18 = arith.constant 0 : index
    %c0_19 = arith.constant 0 : index
    %27 = vector.load %arg8[%c0_18, %c0_19] : memref<1x8xf32, #tpu.memory_space<vmem>>, vector<1x8xf32>
    tpu.vector_store %arg8[%c0_18, %c0_19], %26 {strides = array<i32>} : memref<1x8xf32, #tpu.memory_space<vmem>>, vector<1x8xf32>,
    return
  }
  func.func @transform_0(%arg0: i32) -> (i32, i32) {
    %c0_i32 = arith.constant 0 : i32
    %c0_i32_0 = arith.constant 0 : i32
    return %arg0, %c0_i32 : i32, i32
  }
  func.func @transform_1(%arg0: i32) -> (i32, i32) {
    %c0_i32 = arith.constant 0 : i32
    %c0_i32_0 = arith.constant 0 : i32
    %c0_i32_1 = arith.constant 0 : i32
    return %c0_i32, %c0_i32_0 : i32, i32
  }
  func.func @transform_2(%arg0: i32) -> (i32, i32) {
    %c0_i32 = arith.constant 0 : i32
    %c0_i32_0 = arith.constant 0 : i32
    %c0_i32_1 = arith.constant 0 : i32
    return %c0_i32, %c0_i32_0 : i32, i32
  }
  func.func @transform_3(%arg0: i32) -> (i32, i32) {
    %c0_i32 = arith.constant 0 : i32
    %c0_i32_0 = arith.constant 0 : i32
    %c0_i32_1 = arith.constant 0 : i32
    return %c0_i32, %c0_i32_0 : i32, i32
  }
  func.func @transform_4(%arg0: i32) -> (i32, i32) {
    %c0_i32 = arith.constant 0 : i32
    %c0_i32_0 = arith.constant 0 : i32
    %c0_i32_1 = arith.constant 0 : i32
    return %c0_i32, %c0_i32_0 : i32, i32
  }
  func.func @transform_5(%arg0: i32) -> (i32, i32) {
    %c0_i32 = arith.constant 0 : i32
    %c0_i32_0 = arith.constant 0 : i32
    %c0_i32_1 = arith.constant 0 : i32
    return %c0_i32, %c0_i32_0 : i32, i32
  }
  func.func @transform_6(%arg0: i32) -> (i32, i32) {
    %c0_i32 = arith.constant 0 : i32
    %c0_i32_0 = arith.constant 0 : i32
    %c0_i32_1 = arith.constant 0 : i32
    return %c0_i32, %c0_i32_0 : i32, i32
  }
  func.func @transform_7(%arg0: i32) -> (i32, i32) {
    %c0_i32 = arith.constant 0 : i32
    %c0_i32_0 = arith.constant 0 : i32
    return %c0_i32, %arg0 : i32, i32
  }
}

</mosaic_0001>

<llo_original>
// kernel: tpu_custom_call.1
$region0: #{tpu_custom_call.1}
  #allocation0 [shape = 'u32[]', space=smem, size = 0x4, offset = 0x4, fixed_abs, tag = 'smem constant byte address 0x4 - core index']
  #allocation1 [shape = 'u32[144,128]{1,0:T(1,128)}', space=vmem, size = 0x12000, scoped, tag = 'internal scratch']
  #allocation2 [shape = 'f32[1,1]{1,0:T(1,128)S(1)}', space=vmem, size = 0x200, scoped, tag = 'scoped memory for tpu_custom_call.1']
  %s0 = inlined_call_operand.vmem [shape: bf16[8,32], index: 0, kind: input, shape index: {}]
  %s1 = inlined_call_operand.vmem [shape: bf16[32,256], index: 1, kind: input, shape index: {}]
  %s2 = inlined_call_operand.vmem [shape: f32[1,256], index: 2, kind: input, shape index: {}]
  %s3 = inlined_call_operand.vmem [shape: bf16[256,64], index: 3, kind: input, shape index: {}]
  %s4 = inlined_call_operand.vmem [shape: f32[1,64], index: 4, kind: input, shape index: {}]
  %s5 = inlined_call_operand.vmem [shape: bf16[1,64], index: 5, kind: input, shape index: {}]
  %s6 = inlined_call_operand.<no memory space> [shape: f32[1,1], index: 6, kind: input, shape index: {}]
  %s7 = inlined_call_operand.hbm [shape: f32[1,8], index: 7, kind: output, shape index: {}]
  %s8 = sld [smem:[#allocation0]]
  $region38: #{tpu_custom_call.1} parent=0
    _
  %s10 = ssub.s32 1, %s8
  %s11 = scalar_select 0, %s10, %s8
  %v12 = vstv %s6
  %13 = vst [vmem:[#allocation2] sm:$0x1] %v12
  $region1: #{tpu_custom_call.1} parent=0
    #allocation3 [shape = 'u8[512]{0}', space=vmem, size = 0x400, scoped, tag = 'output window, operand 0, single buffered']
    #allocation4 [shape = 's32[1]{0}', space=sflag, size = 0x4, scoped, tag = 'scoped memory for tpu_custom_call.1']
    %14 = vsyncpa [#allocation4], 0
    // Predicated region
    $region2: #{tpu_custom_call.1} parent=1 // pred_check
      _
    $region3: #{tpu_custom_call.1} parent=1 // pred_check_branch
      %16 = sbr.rel (0) target = $region5
    $region4: #{tpu_custom_call.1} parent=1 // pred_region
      _
    $region5: #{tpu_custom_call.1} parent=1 // pred_fallthru
      _
    // Predicated region
    $region6: #{tpu_custom_call.1} parent=1 // pred_check
      _
    $region7: #{tpu_custom_call.1} parent=1 // pred_check_branch
      %18 = sbr.rel (0) target = $region9
    $region8: #{tpu_custom_call.1} parent=1 // pred_region
      _
    $region9: #{tpu_custom_call.1} parent=1 // pred_fallthru
      _
    // Predicated region
    $region10: #{tpu_custom_call.1} parent=1 // pred_check
      _
    $region11: #{tpu_custom_call.1} parent=1 // pred_check_branch
      %20 = sbr.rel (0) target = $region13
    $region12: #{tpu_custom_call.1} parent=1 // pred_region
      _
    $region13: #{tpu_custom_call.1} parent=1 // pred_fallthru
      _
    // Predicated region
    $region14: #{tpu_custom_call.1} parent=1 // pred_check
      _
    $region15: #{tpu_custom_call.1} parent=1 // pred_check_branch
      %22 = sbr.rel (0) target = $region17
    $region16: #{tpu_custom_call.1} parent=1 // pred_region
      _
    $region17: #{tpu_custom_call.1} parent=1 // pred_fallthru
      _
    // Predicated region
    $region18: #{tpu_custom_call.1} parent=1 // pred_check
      _
    $region19: #{tpu_custom_call.1} parent=1 // pred_check_branch
      %24 = sbr.rel (0) target = $region21
    $region20: #{tpu_custom_call.1} parent=1 // pred_region
      _
    $region21: #{tpu_custom_call.1} parent=1 // pred_fallthru
      _
    // Predicated region
    $region22: #{tpu_custom_call.1} parent=1 // pred_check
      _
    $region23: #{tpu_custom_call.1} parent=1 // pred_check_branch
      %26 = sbr.rel (0) target = $region25
    $region24: #{tpu_custom_call.1} parent=1 // pred_region
      _
    $region25: #{tpu_custom_call.1} parent=1 // pred_fallthru
      _
    // Predicated region
    $region26: #{tpu_custom_call.1} parent=1 // pred_check
      _
    $region27: #{tpu_custom_call.1} parent=1 // pred_check_branch
      %28 = sbr.rel (0) target = $region29
    $region28: #{tpu_custom_call.1} parent=1 // pred_region
      _
    $region29: #{tpu_custom_call.1} parent=1 // pred_fallthru
      _
    %v30 = vld [vmem:[%s0] sm:$0xf]
    %v31 = vld [vmem:[%s1] sm:$0xff]
    %v32 = vld [vmem:[%s1 + $0x8] sm:$0xff]
    %v33 = vld [vmem:[%s1 + $0x10] sm:$0xff]
    %v34 = vld [vmem:[%s1 + $0x18] sm:$0xff]
    %v35 = vld [vmem:[%s2] sm:$0x3]
    %v37 = vlaneseq
    %v38 = vshrl.u32 %v37, 7
    %v39 = vsub.s32 0, %v38
    %v40 = vrot.slane %v35, %v39
    %v41 = vlaneseq
    %v42 = vshrl.u32 %v41, 7
    %v43 = vsub.s32 1, %v42
    %v44 = vrot.slane %v35, %v43
    %v51 = vunpack.c.l.b16 %v31
    %v52 = vunpack.c.h.b16 %v31
    %v53 = vunpack.c.l.b16 %v32
    %v54 = vunpack.c.h.b16 %v32
    %v55 = vunpack.c.l.b16 %v33
    %v56 = vunpack.c.h.b16 %v33
    %v57 = vunpack.c.l.b16 %v34
    %v58 = vunpack.c.h.b16 %v34
    %v59 = vpack.c.b16 %v53, %v51
    %v60 = vpack.c.b16 %v54, %v52
    %v61 = vpack.c.b16 %v57, %v55
    %v62 = vpack.c.b16 %v58, %v56
    %vm67 = vcmask 261120
    %v69 = vsel %vm67, %v30, 0
    %71 = vmatprep.subr.bf16.mxu0 %v60
    %72 = vmatpush1.bf16.msra.mxu0 %v59
    %73 = vmatprep.subr.bf16.mxu0 %v62
    %74 = vmatpush1.bf16.msra.mxu0 %v61
    %75 = vmatprep.subr.bf16.mxu0 0
    %76 = vmatpush1.bf16.msra.mxu0 0
    %77 = vmatprep.subr.bf16.mxu0 0
    %78 = vmatpush1.bf16.msra.mxu0 0
    %79 = vmatprep.subr.bf16.mxu0 0
    %80 = vmatpush1.bf16.msra.mxu0 0
    %81 = vmatprep.subr.bf16.mxu0 0
    %82 = vmatpush1.bf16.msra.mxu0 0
    %83 = vmatprep.subr.bf16.mxu0 0
    %84 = vmatpush1.bf16.msra.mxu0 0
    %85 = vmatprep.subr.bf16.mxu0 0
    %86 = vmatpush1.bf16.msra.mxu0 0
    %87 = vmatprep.subr.bf16.mxu0 0
    %88 = vmatpush1.bf16.msra.mxu0 0
    %89 = vmatprep.subr.bf16.mxu0 0
    %90 = vmatpush1.bf16.msra.mxu0 0
    %91 = vmatprep.subr.bf16.mxu0 0
    %92 = vmatpush1.bf16.msra.mxu0 0
    %93 = vmatprep.subr.bf16.mxu0 0
    %94 = vmatpush1.bf16.msra.mxu0 0
    %95 = vmatprep.subr.bf16.mxu0 0
    %96 = vmatpush1.bf16.msra.mxu0 0
    %97 = vmatprep.subr.bf16.mxu0 0
    %98 = vmatpush1.bf16.msra.mxu0 0
    %99 = vmatprep.subr.bf16.mxu0 0
    %100 = vmatpush1.bf16.msra.mxu0 0
    %101 = vmatprep.subr.bf16.mxu0 0
    %102 = vmatpush1.bf16.msra.mxu0 0
    %103 = vmatprep.mubr.bf16.mxu0 0
    %104 = vmatmul.mubr.bf16.gmra.mrb[0].mxu0 %v69
    %v105 = vpop.f32.mrb[0].mxu0
    %v106 = vadd.f32 %v40, %v105
    %v107 = vpop.f32.mrb[0].mxu0
    %v108 = vadd.f32 %v44, %v107
    %v109 = vpop.f32.mrb[0].mxu0
    %v110 = vpop.f32.mrb[0].mxu0
    %111 = vdwg.mxu0
    %v112 = vmax.f32 %v106, 0.0
    %v113 = vmax.f32 %v108, 0.0
    %v114 = vpack.c.bf16 %v112, %v112
    %v115 = vpack.c.bf16 %v113, %v113
    %v116 = vld [vmem:[%s3] sm:$0xf]
    %v117 = vld [vmem:[%s3 + $0x4] sm:$0xf]
    %v118 = vld [vmem:[%s3 + $0x8] sm:$0xf]
    %v119 = vld [vmem:[%s3 + $0xc] sm:$0xf]
    %v120 = vld [vmem:[%s3 + $0x10] sm:$0xf]
    %v121 = vld [vmem:[%s3 + $0x14] sm:$0xf]
    %v122 = vld [vmem:[%s3 + $0x18] sm:$0xf]
    %v123 = vld [vmem:[%s3 + $0x1c] sm:$0xf]
    %v124 = vld [vmem:[%s3 + $0x20] sm:$0xf]
    %v125 = vld [vmem:[%s3 + $0x24] sm:$0xf]
    %v126 = vld [vmem:[%s3 + $0x28] sm:$0xf]
    %v127 = vld [vmem:[%s3 + $0x2c] sm:$0xf]
    %v128 = vld [vmem:[%s3 + $0x30] sm:$0xf]
    %v129 = vld [vmem:[%s3 + $0x34] sm:$0xf]
    %v130 = vld [vmem:[%s3 + $0x38] sm:$0xf]
    %v131 = vld [vmem:[%s3 + $0x3c] sm:$0xf]
    %v132 = vld [vmem:[%s3 + $0x40] sm:$0xf]
    %v133 = vld [vmem:[%s3 + $0x44] sm:$0xf]
    %v134 = vld [vmem:[%s3 + $0x48] sm:$0xf]
    %v135 = vld [vmem:[%s3 + $0x4c] sm:$0xf]
    %v136 = vld [vmem:[%s3 + $0x50] sm:$0xf]
    %v137 = vld [vmem:[%s3 + $0x54] sm:$0xf]
    %v138 = vld [vmem:[%s3 + $0x58] sm:$0xf]
    %v139 = vld [vmem:[%s3 + $0x5c] sm:$0xf]
    %v140 = vld [vmem:[%s3 + $0x60] sm:$0xf]
    %v141 = vld [vmem:[%s3 + $0x64] sm:$0xf]
    %v142 = vld [vmem:[%s3 + $0x68] sm:$0xf]
    %v143 = vld [vmem:[%s3 + $0x6c] sm:$0xf]
    %v144 = vld [vmem:[%s3 + $0x70] sm:$0xf]
    %v145 = vld [vmem:[%s3 + $0x74] sm:$0xf]
    %v146 = vld [vmem:[%s3 + $0x78] sm:$0xf]
    %v147 = vld [vmem:[%s3 + $0x7c] sm:$0xf]
    %v148 = vld [vmem:[%s4] sm:$0x1]
    %v150 = vlaneseq
    %v151 = vshrl.u32 %v150, 7
    %v152 = vsub.s32 0, %v151
    %v153 = vrot.slane %v148, %v152
    %v187 = vunpack.c.l.b16 %v116
    %v188 = vunpack.c.l.b16 %v117
    %v189 = vunpack.c.l.b16 %v118
    %v190 = vunpack.c.l.b16 %v119
    %v191 = vunpack.c.l.b16 %v120
    %v192 = vunpack.c.l.b16 %v121
    %v193 = vunpack.c.l.b16 %v122
    %v194 = vunpack.c.l.b16 %v123
    %v195 = vunpack.c.l.b16 %v124
    %v196 = vunpack.c.l.b16 %v125
    %v197 = vunpack.c.l.b16 %v126
    %v198 = vunpack.c.l.b16 %v127
    %v199 = vunpack.c.l.b16 %v128
    %v200 = vunpack.c.l.b16 %v129
    %v201 = vunpack.c.l.b16 %v130
    %v202 = vunpack.c.l.b16 %v131
    %v203 = vunpack.c.l.b16 %v132
    %v204 = vunpack.c.l.b16 %v133
    %v205 = vunpack.c.l.b16 %v134
    %v206 = vunpack.c.l.b16 %v135
    %v207 = vunpack.c.l.b16 %v136
    %v208 = vunpack.c.l.b16 %v137
    %v209 = vunpack.c.l.b16 %v138
    %v210 = vunpack.c.l.b16 %v139
    %v211 = vunpack.c.l.b16 %v140
    %v212 = vunpack.c.l.b16 %v141
    %v213 = vunpack.c.l.b16 %v142
    %v214 = vunpack.c.l.b16 %v143
    %v215 = vunpack.c.l.b16 %v144
    %v216 = vunpack.c.l.b16 %v145
    %v217 = vunpack.c.l.b16 %v146
    %v218 = vunpack.c.l.b16 %v147
    %v219 = vpack.c.b16 %v188, %v187
    %v220 = vpack.c.b16 %v190, %v189
    %v221 = vpack.c.b16 %v192, %v191
    %v222 = vpack.c.b16 %v194, %v193
    %v223 = vpack.c.b16 %v196, %v195
    %v224 = vpack.c.b16 %v198, %v197
    %v225 = vpack.c.b16 %v200, %v199
    %v226 = vpack.c.b16 %v202, %v201
    %v227 = vpack.c.b16 %v204, %v203
    %v228 = vpack.c.b16 %v206, %v205
    %v229 = vpack.c.b16 %v208, %v207
    %v230 = vpack.c.b16 %v210, %v209
    %v231 = vpack.c.b16 %v212, %v211
    %v232 = vpack.c.b16 %v214, %v213
    %v233 = vpack.c.b16 %v216, %v215
    %v234 = vpack.c.b16 %v218, %v217
    %251 = vmatprep.subr.bf16.mxu0 0
    %252 = vmatpush1.bf16.msra.mxu0 %v219
    %253 = vmatprep.subr.bf16.mxu0 0
    %254 = vmatpush1.bf16.msra.mxu0 %v220
    %255 = vmatprep.subr.bf16.mxu0 0
    %256 = vmatpush1.bf16.msra.mxu0 %v221
    %257 = vmatprep.subr.bf16.mxu0 0
    %258 = vmatpush1.bf16.msra.mxu0 %v222
    %259 = vmatprep.subr.bf16.mxu0 0
    %260 = vmatpush1.bf16.msra.mxu0 %v223
    %261 = vmatprep.subr.bf16.mxu0 0
    %262 = vmatpush1.bf16.msra.mxu0 %v224
    %263 = vmatprep.subr.bf16.mxu0 0
    %264 = vmatpush1.bf16.msra.mxu0 %v225
    %265 = vmatprep.subr.bf16.mxu0 0
    %266 = vmatpush1.bf16.msra.mxu0 %v226
    %267 = vmatprep.subr.bf16.mxu0 0
    %268 = vmatpush1.bf16.msra.mxu0 %v227
    %269 = vmatprep.subr.bf16.mxu0 0
    %270 = vmatpush1.bf16.msra.mxu0 %v228
    %271 = vmatprep.subr.bf16.mxu0 0
    %272 = vmatpush1.bf16.msra.mxu0 %v229
    %273 = vmatprep.subr.bf16.mxu0 0
    %274 = vmatpush1.bf16.msra.mxu0 %v230
    %275 = vmatprep.subr.bf16.mxu0 0
    %276 = vmatpush1.bf16.msra.mxu0 %v231
    %277 = vmatprep.subr.bf16.mxu0 0
    %278 = vmatpush1.bf16.msra.mxu0 %v232
    %279 = vmatprep.subr.bf16.mxu0 0
    %280 = vmatpush1.bf16.msra.mxu0 %v233
    %281 = vmatprep.subr.bf16.mxu0 0
    %282 = vmatpush1.bf16.msra.mxu0 %v234
    %283 = vmatprep.mubr.bf16.mxu0 %v115
    %284 = vmatmul.mubr.bf16.gmra.mrb[0].mxu0 %v114
    %v285 = vpop.f32.mrb[0].mxu0
    %v286 = vadd.f32 %v153, %v285
    %v287 = vpop.f32.mrb[0].mxu0
    %v288 = vpop.f32.mrb[0].mxu0
    %v289 = vpop.f32.mrb[0].mxu0
    %290 = vdwg.mxu0
    %v291 = vmax.f32 %v286, 0.0
    %v292 = vld [vmem:[%s5] sm:$0x1]
    %v293 = vpack.c.bf16 %v291, %v291
    %v294 = vld [vmem:[#allocation2] sm:$0x1]
    %296 = vset.pattern.permute.xlu0 0
    %297 = vperm.xlu0 %296, %v294
    %v298 = vpop.permute.xlu0 %297
    %v300 = vlaneseq
    %v301 = vshrl.u32 %v300, 7
    %v302 = vsub.s32 0, %v301
    %v303 = vrot.slane %v298, %v302
    %vm304 = vcmask 523264
    %v306 = vsel %vm304, %v292, 0
    %v309 = vsel %vm304, %v293, 0
    %311 = vmatprep.subr.bf16.mxu0 0
    %312 = vmatpush1.bf16.xpose.msra.mxu0 %v309
    %313 = vmatprep.subr.bf16.mxu0 0
    %314 = vmatpush1.bf16.xpose.msra.mxu0 0
    %315 = vmatprep.subr.bf16.mxu0 0
    %316 = vmatpush1.bf16.xpose.msra.mxu0 0
    %317 = vmatprep.subr.bf16.mxu0 0
    %318 = vmatpush1.bf16.xpose.msra.mxu0 0
    %319 = vmatprep.subr.bf16.mxu0 0
    %320 = vmatpush1.bf16.xpose.msra.mxu0 0
    %321 = vmatprep.subr.bf16.mxu0 0
    %322 = vmatpush1.bf16.xpose.msra.mxu0 0
    %323 = vmatprep.subr.bf16.mxu0 0
    %324 = vmatpush1.bf16.xpose.msra.mxu0 0
    %325 = vmatprep.subr.bf16.mxu0 0
    %326 = vmatpush1.bf16.xpose.msra.mxu0 0
    %327 = vmatprep.subr.bf16.mxu0 0
    %328 = vmatpush1.bf16.xpose.msra.mxu0 0
    %329 = vmatprep.subr.bf16.mxu0 0
    %330 = vmatpush1.bf16.xpose.msra.mxu0 0
    %331 = vmatprep.subr.bf16.mxu0 0
    %332 = vmatpush1.bf16.xpose.msra.mxu0 0
    %333 = vmatprep.subr.bf16.mxu0 0
    %334 = vmatpush1.bf16.xpose.msra.mxu0 0
    %335 = vmatprep.subr.bf16.mxu0 0
    %336 = vmatpush1.bf16.xpose.msra.mxu0 0
    %337 = vmatprep.subr.bf16.mxu0 0
    %338 = vmatpush1.bf16.xpose.msra.mxu0 0
    %339 = vmatprep.subr.bf16.mxu0 0
    %340 = vmatpush1.bf16.xpose.msra.mxu0 0
    %341 = vmatprep.subr.bf16.mxu0 0
    %342 = vmatpush1.bf16.xpose.msra.mxu0 0
    %343 = vmatprep.mubr.bf16.mxu0 0
    %344 = vmatmul.mubr.bf16.gmra.mrb[0].mxu0 %v306
    %v345 = vpop.f32.mrb[0].mxu0
    %v346 = vadd.f32 %v303, %v345
    %v347 = vpop.f32.mrb[0].mxu0
    %v348 = vpop.f32.mrb[0].mxu0
    %v349 = vpop.f32.mrb[0].mxu0
    %350 = vdwg.mxu0
    %v351 = vxor.u32 %v346, 2147483648
    %v352 = vmul.f32 %v351, 1.442695
    %v353 = vpow.pop %v352
    %v354 = vadd.f32 %v353, 1.0
    %v355 = vrcp.pop %v354
    %v356 = vmul.f32 1.0, %v355
    %vm357 = vcmask 57344
    %358 = vst.msk [vmem:[#allocation3] sm:$0x1] %vm357, %v356
    // Predicated region
    $region30: #{tpu_custom_call.1} parent=1 // pred_check
      _
    $region31: #{tpu_custom_call.1} parent=1 // pred_check_branch
      %360 = sbr.rel (0) target = $region33
    $region32: #{tpu_custom_call.1} parent=1 // pred_region
      %s362 = ssub.s32 16, 16
      %363 = vsyncadd [#allocation4], %s362
      %s365 = sshll.u32 [#allocation3], 4
      %s366 = int_to_ptr.vmem [resolvable:$true] %s365
      %368 = dma.vmem_to_hbm [thread:$0]  %s366, 16, %s7, [#allocation4]
    $region33: #{tpu_custom_call.1} parent=1 // pred_fallthru
      _
    // Predicated region
    $region34: #{tpu_custom_call.1} parent=1 // pred_check
      _
    $region35: #{tpu_custom_call.1} parent=1 // pred_check_branch
      %370 = sbr.rel (0) target = $region37
    $region36: #{tpu_custom_call.1} parent=1 // pred_region
      %371 = dma.done [#allocation4], 16
    $region37: #{tpu_custom_call.1} parent=1 // pred_fallthru
      _
    %372 = vsyncpa [#allocation4], 1

</llo_original>
